<compile_context>
chip_gen: v5e
topology: v5e:2x2
jax: 0.10.0
libtpu: 0.0.40
codegen_flags: <defaults>
</compile_context>

<pallas_src>
import jax
import jax.numpy as jnp
from jax.experimental import pallas as pl
from jax.experimental.pallas import tpu as pltpu


# ----------------------------------------------------------------------------
# Kernel
# ----------------------------------------------------------------------------
def _satt_kernel(xq_ref, kT_ref, v_ref, wq_ref, wz_ref, bias_ref, out_ref):
    # xq_ref  : (C, T)  f32   query tile (T = tile of Nq), streamed per step
    # kT_ref  : (Nk, C) bf16  K^T / Nk, resident across the Nq axis
    # v_ref   : (C, Nk) bf16  V, resident across the Nq axis
    # wq/wz   : (C, C)  bf16  1x1-conv weights (BN scale folded into wz)
    # bias    : (C, 1)  f32   folded BN bias
    xq_f32 = xq_ref[...]                                   # keep f32 for residual
    xq = xq_f32.astype(jnp.bfloat16)

    q = jnp.dot(wq_ref[...], xq, preferred_element_type=jnp.float32)     # (C, T)
    q = q.astype(jnp.bfloat16)

    # attn^T = (K^T / Nk) @ Q -> (Nk, T): canonical contraction, lane-dense
    # along T (T is a multiple of 128 whenever Nq allows).
    attn_t = jnp.dot(kT_ref[...], q, preferred_element_type=jnp.float32)  # (Nk, T)
    attn_t = attn_t.astype(jnp.bfloat16)

    # qkv = V @ attn^T -> (C, T): canonical contraction over Nk.
    qkv = jnp.dot(v_ref[...], attn_t, preferred_element_type=jnp.float32)  # (C, T)
    qkv = qkv.astype(jnp.bfloat16)

    # W_z with BN scale pre-folded; bias add + f32 residual.
    z = jnp.dot(wz_ref[...], qkv, preferred_element_type=jnp.float32)      # (C, T)
    out_ref[...] = (z + bias_ref[...] + xq_f32).astype(out_ref.dtype)


# ----------------------------------------------------------------------------
# VMEM-aware tiling helpers
# ----------------------------------------------------------------------------
def _vmem_capacity_bytes():
    try:
        return int(pltpu.get_tpu_info().vmem_capacity_bytes)
    except Exception:            # conservative default: v7x per-core physical
        return 64 * 1024 * 1024


def _pick_tile_nq(nq, nk, c, out_bytes, budget):
    """Largest lane-dense Nq tile whose working set fits the VMEM budget."""
    candidates = [t for t in (4096, 2048, 1024, 512, 256, 128) if nq % t == 0]
    if not candidates:
        candidates = [nq]                # full width (legal: equals full dim)
    for t in candidates:                 # largest first
        xq_b = 2 * c * t * 4             # f32 query tile, double-buffered
        out_b = 2 * c * t * out_bytes    # output tile, double-buffered
        kv_b = 2 * 2 * (nk * c * 2)      # K^T + V (bf16), double-buffered
        w_b = 2 * (c * c * 2) + c * 128 * 4   # Wq + Wz (single buf) + padded bias
        attn_b = nk * t * 6              # f32 attn^T + bf16 copy
        tmp_b = 3 * c * t * 4            # q / qkv / z f32 intermediates
        if xq_b + out_b + kv_b + w_b + attn_b + tmp_b <= budget:
            return t
    return candidates[-1]                # smallest legal tile


def _resident_spec(block_shape, index_map):
    """Grid-invariant operand: one VMEM buffer is enough (no double buffering)."""
    try:
        return pl.BlockSpec(block_shape, index_map, pipeline_mode=pl.Buffered(1))
    except (TypeError, AttributeError):
        return pl.BlockSpec(block_shape, index_map)


# ----------------------------------------------------------------------------
# Wrapper
# ----------------------------------------------------------------------------
def satt_forward(q_feat, kv_feat, params, eps=1e-5, tile_nq=None,
                 out_dtype=jnp.bfloat16):
    """q_feat: (B, C, H, W) NCHW; kv_feat: (B, C, Hk, Wk) NCHW."""
    B, C, H, W = q_feat.shape
    Bk, Ck, Hk, Wk = kv_feat.shape
    assert B == Bk and C == Ck
    assert H == W, "torch module's view/residual semantics require H == W"
    Nq, Nk = H * W, Hk * Wk

    out_bytes = jnp.dtype(out_dtype).itemsize
    vmem_cap = _vmem_capacity_bytes()
    vmem_limit = int(min(vmem_cap * 0.85, 120 * 1024 * 1024))
    if tile_nq is None:
        tile_nq = _pick_tile_nq(Nq, Nk, C, out_bytes, int(vmem_limit * 0.9))
    assert Nq % tile_nq == 0

    # Query activations stay f32; cast to bf16 happens per-tile in the kernel.
    xq = q_feat.reshape(B, C, Nq).astype(jnp.float32)
    xkv = kv_feat.reshape(B, C, Nk).astype(jnp.bfloat16)

    # Fold BatchNorm2d (inference) into Wz (scale) and a per-channel bias.
    # TODO(synk): training-mode BatchNorm (batch statistics) is not reproduced.
    scale = (params["gamma"] / jnp.sqrt(params["running_var"] + eps)).astype(jnp.float32)
    bias = (params["beta"].astype(jnp.float32)
            - params["running_mean"].astype(jnp.float32) * scale).reshape(C, 1)
    wz = (scale[:, None] * params["wz"].astype(jnp.float32)).astype(jnp.bfloat16)
    wq = params["wq"].astype(jnp.bfloat16)
    wk = params["wk"].astype(jnp.bfloat16)
    wv = params["wv"].astype(jnp.bfloat16)

    # Hoisted K/V projection (once per batch, XLA). K^T is pre-scaled by 1/Nk
    # so both in-kernel attention matmuls contract canonical axes.
    kT = (jnp.einsum("oc,bcn->bno", wk, xkv,
                     preferred_element_type=jnp.float32) * (1.0 / Nk)
          ).astype(jnp.bfloat16)                                      # (B, Nk, C)
    v = jnp.einsum("oc,bcn->bon", wv, xkv,
                   preferred_element_type=jnp.float32).astype(jnp.bfloat16)  # (B, C, Nk)

    grid = (B, Nq // tile_nq)

    out = pl.pallas_call(
        _satt_kernel,
        out_shape=jax.ShapeDtypeStruct((B, C, Nq), out_dtype),
        grid_spec=pltpu.PrefetchScalarGridSpec(
            num_scalar_prefetch=0,
            grid=grid,
            in_specs=[
                # xq: streams per (batch, nq-tile), f32
                pl.BlockSpec((pl.Squeezed(), C, tile_nq), lambda b, t: (b, 0, t)),
                # K^T / Nk and V: resident across the nq axis, change with batch
                pl.BlockSpec((pl.Squeezed(), Nk, C), lambda b, t: (b, 0, 0)),
                pl.BlockSpec((pl.Squeezed(), C, Nk), lambda b, t: (b, 0, 0)),
                # grid-invariant weights / bias: single buffer
                _resident_spec((C, C), lambda b, t: (0, 0)),   # Wq
                _resident_spec((C, C), lambda b, t: (0, 0)),   # Wz (BN folded)
                _resident_spec((C, 1), lambda b, t: (0, 0)),   # BN bias
            ],
            out_specs=pl.BlockSpec((pl.Squeezed(), C, tile_nq),
                                   lambda b, t: (b, 0, t)),
        ),
        # K/V are precomputed, so both axes are fully independent -> megacore
        # can shard either axis (important for v7x's 2 TensorCores).
        compiler_params=pltpu.CompilerParams(
            dimension_semantics=("parallel", "parallel"),
            vmem_limit_bytes=vmem_limit),
    )(xq, kT, v, wq, wz, bias)

    # torch: QKV.view(B, C, W, -1); with H == W this equals (B, C, H, W).
    return out.reshape(B, C, W, Nq // W)


# ----------------------------------------------------------------------------
# Pure-JAX f32 reference mirroring the torch module
# ----------------------------------------------------------------------------
def satt_reference(q_feat, kv_feat, params, eps=1e-5):
    B, C, H, W = q_feat.shape
    Nk = kv_feat.shape[2] * kv_feat.shape[3]
    xq = q_feat.reshape(B, C, -1).astype(jnp.float32)
    xkv = kv_feat.reshape(B, C, -1).astype(jnp.float32)
    Q = jnp.einsum("oc,bcn->bon", params["wq"], xq)
    K = jnp.einsum("oc,bcn->bon", params["wk"], xkv)
    V = jnp.einsum("oc,bcn->bon", params["wv"], xkv)
    attn = jnp.einsum("bcq,bck->bqk", Q, K) / Nk
    QKV = jnp.einsum("bqk,bck->bcq", attn, V)
    Z = jnp.einsum("oc,bcq->boq", params["wz"], QKV)
    scale = params["gamma"] / jnp.sqrt(params["running_var"] + eps)
    bias = params["beta"] - params["running_mean"] * scale
    Z = Z * scale[None, :, None] + bias[None, :, None]
    out = Z + xq
    return out.reshape(B, C, W, -1)


def init_params(key, C):
    ks = jax.random.split(key, 8)
    s = 0.1
    return {
        "wq": s * jax.random.normal(ks[0], (C, C), jnp.float32),
        "wk": s * jax.random.normal(ks[1], (C, C), jnp.float32),
        "wv": s * jax.random.normal(ks[2], (C, C), jnp.float32),
        "wz": s * jax.random.normal(ks[3], (C, C), jnp.float32),
        "gamma": 1.0 + 0.05 * jax.random.normal(ks[4], (C,), jnp.float32),
        "beta": 0.05 * jax.random.normal(ks[5], (C,), jnp.float32),
        "running_mean": 0.05 * jax.random.normal(ks[6], (C,), jnp.float32),
        "running_var": 1.0 + 0.1 * jnp.abs(jax.random.normal(ks[7], (C,), jnp.float32)),
    }


if __name__ == "__main__":
    key = jax.random.PRNGKey(0)
    k_q, k_kv, k_p = jax.random.split(key, 3)

    B, C = 2, 32
    H = W = 16          # query spatial   -> Nq = 256
    Hk = Wk = 8         # key/val spatial -> Nk = 64

    q_feat = jax.random.normal(k_q, (B, C, H, W), jnp.float32)
    kv_feat = jax.random.normal(k_kv, (B, C, Hk, Wk), jnp.float32)
    params = init_params(k_p, C)

    # tile_nq=128 exercises the multi-tile path (two nq tiles per batch elem).
    out = satt_forward(q_feat, kv_feat, params, tile_nq=128)
    jax.block_until_ready(out)
    assert out.shape == (B, C, H, W)

    ref = satt_reference(q_feat, kv_feat, params)
    err = float(jnp.max(jnp.abs(out.astype(jnp.float32) - ref)))
    assert err < 1e-1, f"max abs err too large: {err}"
    print("KERNEL_OK")
</pallas_src>

<mosaic_0001>
module attributes {stable_mosaic.version = 11 : i64} {
  func.func @_satt_kernel(%arg0: i32, %arg1: i32, %arg2: memref<1x32x128xf32, #tpu.memory_space<vmem>>, %arg3: memref<1x64x32xbf16, #tpu.memory_space<vmem>>, %arg4: memref<1x32x64xbf16, #tpu.memory_space<vmem>>, %arg5: memref<32x32xbf16, #tpu.memory_space<vmem>>, %arg6: memref<32x32xbf16, #tpu.memory_space<vmem>>, %arg7: memref<32x1xf32, #tpu.memory_space<vmem>>, %arg8: memref<1x32x128xbf16, #tpu.memory_space<vmem>>) attributes {dimension_semantics = [#tpu.dimension_semantics<parallel>, #tpu.dimension_semantics<parallel>], iteration_bounds = array<i64: 2, 2>, scalar_prefetch = 0 : i64, scratch_operands = 0 : i64, tpu.core_type = #tpu.core_type<tc>, window_params = [{transform_indices = @transform_0, window_bounds = array<i64: 1, 32, 128>}, {transform_indices = @transform_1, window_bounds = array<i64: 1, 64, 32>}, {transform_indices = @transform_2, window_bounds = array<i64: 1, 32, 64>}, {pipeline_mode = #tpu.pipeline_mode<synchronous>, transform_indices = @transform_3, window_bounds = array<i64: 32, 32>}, {pipeline_mode = #tpu.pipeline_mode<synchronous>, transform_indices = @transform_4, window_bounds = array<i64: 32, 32>}, {pipeline_mode = #tpu.pipeline_mode<synchronous>, transform_indices = @transform_5, window_bounds = array<i64: 32, 1>}, {transform_indices = @transform_6, window_bounds = array<i64: 1, 32, 128>}]} {
    %c0 = arith.constant 0 : index
    %c0_0 = arith.constant 0 : index
    %c0_1 = arith.constant 0 : index
    %0 = vector.load %arg2[%c0, %c0_0, %c0_1] : memref<1x32x128xf32, #tpu.memory_space<vmem>>, vector<1x32x128xf32>
    %1 = vector.shape_cast %0 : vector<1x32x128xf32> to vector<32x128xf32>
    %2 = arith.truncf %1 : vector<32x128xf32> to vector<32x128xbf16>
    %c0_2 = arith.constant 0 : index
    %c0_3 = arith.constant 0 : index
    %3 = vector.load %arg5[%c0_2, %c0_3] : memref<32x32xbf16, #tpu.memory_space<vmem>>, vector<32x32xbf16>
    %cst = arith.constant dense<0.000000e+00> : vector<32x128xf32>
    %4 = tpu.matmul %3, %2, %cst {dimension_numbers = #tpu.dot_dimension_numbers<[1], [0], [0], [1], [0, 0, 1, 1], [], []>} : vector<32x32xbf16>, vector<32x128xbf16>, vector<32x128xf32> -> vector<32x128xf32>
    %5 = arith.truncf %4 : vector<32x128xf32> to vector<32x128xbf16>
    %c0_4 = arith.constant 0 : index
    %c0_5 = arith.constant 0 : index
    %c0_6 = arith.constant 0 : index
    %6 = vector.load %arg3[%c0_4, %c0_5, %c0_6] : memref<1x64x32xbf16, #tpu.memory_space<vmem>>, vector<1x64x32xbf16>
    %7 = vector.shape_cast %6 : vector<1x64x32xbf16> to vector<64x32xbf16>
    %cst_7 = arith.constant dense<0.000000e+00> : vector<64x128xf32>
    %8 = tpu.matmul %7, %5, %cst_7 {dimension_numbers = #tpu.dot_dimension_numbers<[1], [0], [0], [1], [0, 0, 1, 1], [], []>} : vector<64x32xbf16>, vector<32x128xbf16>, vector<64x128xf32> -> vector<64x128xf32>
    %9 = arith.truncf %8 : vector<64x128xf32> to vector<64x128xbf16>
    %c0_8 = arith.constant 0 : index
    %c0_9 = arith.constant 0 : index
    %c0_10 = arith.constant 0 : index
    %10 = vector.load %arg4[%c0_8, %c0_9, %c0_10] : memref<1x32x64xbf16, #tpu.memory_space<vmem>>, vector<1x32x64xbf16>
    %11 = vector.shape_cast %10 : vector<1x32x64xbf16> to vector<32x64xbf16>
    %cst_11 = arith.constant dense<0.000000e+00> : vector<32x128xf32>
    %12 = tpu.matmul %11, %9, %cst_11 {dimension_numbers = #tpu.dot_dimension_numbers<[1], [0], [0], [1], [0, 0, 1, 1], [], []>} : vector<32x64xbf16>, vector<64x128xbf16>, vector<32x128xf32> -> vector<32x128xf32>
    %13 = arith.truncf %12 : vector<32x128xf32> to vector<32x128xbf16>
    %c0_12 = arith.constant 0 : index
    %c0_13 = arith.constant 0 : index
    %14 = vector.load %arg6[%c0_12, %c0_13] : memref<32x32xbf16, #tpu.memory_space<vmem>>, vector<32x32xbf16>
    %cst_14 = arith.constant dense<0.000000e+00> : vector<32x128xf32>
    %15 = tpu.matmul %14, %13, %cst_14 {dimension_numbers = #tpu.dot_dimension_numbers<[1], [0], [0], [1], [0, 0, 1, 1], [], []>} : vector<32x32xbf16>, vector<32x128xbf16>, vector<32x128xf32> -> vector<32x128xf32>
    %c0_15 = arith.constant 0 : index
    %c0_16 = arith.constant 0 : index
    %16 = vector.load %arg7[%c0_15, %c0_16] : memref<32x1xf32, #tpu.memory_space<vmem>>, vector<32x1xf32>
    %17 = vector.broadcast %16 : vector<32x1xf32> to vector<32x128xf32>
    %18 = arith.addf %15, %17 : vector<32x128xf32>
    %19 = arith.addf %18, %1 : vector<32x128xf32>
    %20 = arith.truncf %19 : vector<32x128xf32> to vector<32x128xbf16>
    %c0_17 = arith.constant 0 : index
    %c0_18 = arith.constant 0 : index
    %c0_19 = arith.constant 0 : index
    %21 = vector.load %arg8[%c0_17, %c0_18, %c0_19] : memref<1x32x128xbf16, #tpu.memory_space<vmem>>, vector<1x32x128xbf16>
    %22 = vector.shape_cast %21 : vector<1x32x128xbf16> to vector<32x128xbf16>
    %23 = vector.shape_cast %20 : vector<32x128xbf16> to vector<1x32x128xbf16>
    tpu.vector_store %arg8[%c0_17, %c0_18, %c0_19], %23 {strides = array<i32>} : memref<1x32x128xbf16, #tpu.memory_space<vmem>>, vector<1x32x128xbf16>,
    return
  }
  func.func @transform_0(%arg0: i32, %arg1: i32) -> (i32, i32, i32) {
    %c0_i32 = arith.constant 0 : i32
    %c0_i32_0 = arith.constant 0 : i32
    return %arg0, %c0_i32, %arg1 : i32, i32, i32
  }
  func.func @transform_1(%arg0: i32, %arg1: i32) -> (i32, i32, i32) {
    %c0_i32 = arith.constant 0 : i32
    %c0_i32_0 = arith.constant 0 : i32
    %c0_i32_1 = arith.constant 0 : i32
    return %arg0, %c0_i32, %c0_i32_0 : i32, i32, i32
  }
  func.func @transform_2(%arg0: i32, %arg1: i32) -> (i32, i32, i32) {
    %c0_i32 = arith.constant 0 : i32
    %c0_i32_0 = arith.constant 0 : i32
    %c0_i32_1 = arith.constant 0 : i32
    return %arg0, %c0_i32, %c0_i32_0 : i32, i32, i32
  }
  func.func @transform_3(%arg0: i32, %arg1: i32) -> (i32, i32) {
    %c0_i32 = arith.constant 0 : i32
    %c0_i32_0 = arith.constant 0 : i32
    %c0_i32_1 = arith.constant 0 : i32
    return %c0_i32, %c0_i32_0 : i32, i32
  }
  func.func @transform_4(%arg0: i32, %arg1: i32) -> (i32, i32) {
    %c0_i32 = arith.constant 0 : i32
    %c0_i32_0 = arith.constant 0 : i32
    %c0_i32_1 = arith.constant 0 : i32
    return %c0_i32, %c0_i32_0 : i32, i32
  }
  func.func @transform_5(%arg0: i32, %arg1: i32) -> (i32, i32) {
    %c0_i32 = arith.constant 0 : i32
    %c0_i32_0 = arith.constant 0 : i32
    %c0_i32_1 = arith.constant 0 : i32
    return %c0_i32, %c0_i32_0 : i32, i32
  }
  func.func @transform_6(%arg0: i32, %arg1: i32) -> (i32, i32, i32) {
    %c0_i32 = arith.constant 0 : i32
    %c0_i32_0 = arith.constant 0 : i32
    return %arg0, %c0_i32, %arg1 : i32, i32, i32
  }
}

</mosaic_0001>

<llo_original>
// kernel: tpu_custom_call.1
$region0: #{tpu_custom_call.1}
  #allocation0 [shape = 'u32[]', space=smem, size = 0x4, offset = 0x4, fixed_abs, tag = 'smem constant byte address 0x4 - core index']
  #allocation1 [shape = 'u32[72,128]{1,0:T(1,128)}', space=vmem, size = 0x9000, scoped, tag = 'internal scratch']
  %s0 = inlined_call_operand.hbm [shape: f32[2,32,256], index: 0, kind: input, shape index: {}]
  %s1 = inlined_call_operand.vmem [shape: bf16[2,64,32], index: 1, kind: input, shape index: {}]
  %s2 = inlined_call_operand.vmem [shape: bf16[2,32,64], index: 2, kind: input, shape index: {}]
  %s3 = inlined_call_operand.vmem [shape: bf16[32,32], index: 3, kind: input, shape index: {}]
  %s4 = inlined_call_operand.vmem [shape: bf16[32,32], index: 4, kind: input, shape index: {}]
  %s5 = inlined_call_operand.vmem [shape: f32[32,1], index: 5, kind: input, shape index: {}]
  %s6 = inlined_call_operand.hbm [shape: bf16[2,32,256], index: 6, kind: output, shape index: {}]
  %s7 = sld [smem:[#allocation0]]
  $region61: #{tpu_custom_call.1} parent=0
    _
  %s9 = ssub.s32 1, %s7
  %s10 = scalar_select 0, %s9, %s7
  $region1: #{tpu_custom_call.1} parent=0
    #allocation2 [shape = 'u8[32768]{0}', space=vmem, size = 0x8000, scoped, tag = 'input window, operand 0']
    #allocation3 [shape = 's32[2]{0}', space=sflag, size = 0x8, scoped, tag = 'scoped memory for tpu_custom_call.1']
    #allocation4 [shape = 's32[2]{0}', space=sflag, size = 0x8, scoped, tag = 'scoped memory for tpu_custom_call.1']
    #allocation5 [shape = 'u8[16384]{0}', space=vmem, size = 0x4000, scoped, tag = 'output window, operand 0']
    %11 = vsyncpa [#allocation3], 0
    %s12 = scalar_lea.sflag [#allocation3], 1
    %13 = vsyncpa %s12, 0
    %14 = vsyncpa [#allocation4], 0
    %s15 = scalar_lea.sflag [#allocation4], 1
    %16 = vsyncpa %s15, 0
    loop: start=0, step=1, limit=6
    $region2: #{tpu_custom_call.1} parent=1 // loop_pre_header
      _
    $region3: #{tpu_custom_call.1} parent=1 // loop_header
      %s18 = sphi 0, %s22
      %p19 = scmp.ge.s32.totalorder %s18, 6
      %s25 = sphi 0, %s37
      %s26 = sphi 0, %s33
      %s27 = sphi 0, %s25
      %s28 = sphi 0, %s26
      %s29 = sphi 0, %s27
      %s30 = sphi 0, %s28
      %s42 = sphi 0, %s44
      %s45 = sphi 0, %s42
      %s46 = sphi 0, %s45
      %s62 = sphi 0, %s46
      %s68 = sphi 0, %s70
      %s71 = sphi 0, %s68
      %s72 = sphi 0, %s71
      %s88 = sphi 0, %s72
      %s94 = sphi 0, %s96
      %s97 = sphi 0, %s94
      %s98 = sphi 0, %s97
      %s114 = sphi 0, %s98
      %s118 = sphi 0, %s118
      %s120 = sphi 0, %s118
      %s121 = sphi 0, %s120
      %s135 = sphi 0, %s121
      %s139 = sphi 0, %s139
      %s141 = sphi 0, %s139
      %s142 = sphi 0, %s141
      %s156 = sphi 0, %s142
      %s160 = sphi 0, %s160
      %s162 = sphi 0, %s160
      %s163 = sphi 0, %s162
      %s177 = sphi 0, %s163
      %s185 = sphi 0, %s187
      %s188 = sphi 0, %s185
      %s189 = sphi 0, %s188
      %s205 = sphi 0, %s189
    $region4: #{tpu_custom_call.1} parent=1 // loop_header_branch
      %21 = sbr.rel (%p19) target = $region8
    $region5: #{tpu_custom_call.1} parent=1 // loop_body
      %s23 = ssub.s32 %s18, 1
      %s24 = ssub.s32 %s18, 2
      %s31 = sadd.s32 1, %s26
      %p32 = scmp.ge.s32.totalorder %s31, 2
      %s33 = scalar_select %p32, 0, %s31
      %s34 = sadd.s32 1, %s25
      %s35 = scalar_select %p32, %s34, %s25
      %p36 = scmp.ge.s32.totalorder %s35, 2
      %s37 = scalar_select %p36, 0, %s35
      %s38 = ssub.s32 %s25, %s37
      %s39 = ssub.s32 %s26, %s33
      %s40 = sor.u32 %s38, %s39
      %p41 = scmp.eq.s32.totalorder %s40, 0
      %s43 = sadd.s32 %s42, 1
      %s44 = scalar_select %p41, %s42, %s43
      %p47 = pneg %p41
      %p48 = scmp.eq.s32.totalorder %s18, 3
      %p49 = por %p47, %p48
      %p50 = scmp.ne.s32.totalorder %s42, %s45
      %p51 = scmp.eq.s32.totalorder %s18, 0
      %p52 = por %p50, %p51
      %p53 = scmp.ne.s32.totalorder %s42, %s45
      %p54 = scmp.eq.s32.totalorder %s23, 3
      %p55 = por %p53, %p54
      %p56 = scmp.ne.s32.totalorder %s45, %s46
      %p57 = scmp.eq.s32.totalorder %s23, 0
      %p58 = por %p56, %p57
      %p59 = scmp.ne.s32.totalorder %s45, %s46
      %p60 = scmp.eq.s32.totalorder %s24, 3
      %p61 = por %p59, %p60
      %p63 = scmp.ne.s32.totalorder %s46, %s62
      %p64 = scmp.eq.s32.totalorder %s24, 0
      %p65 = por %p63, %p64
      %s66 = ssub.s32 %s25, %s37
      %p67 = scmp.eq.s32.totalorder %s66, 0
      %s69 = sadd.s32 %s68, 1
      %s70 = scalar_select %p67, %s68, %s69
      %p73 = pneg %p67
      %p74 = scmp.eq.s32.totalorder %s18, 3
      %p75 = por %p73, %p74
      %p76 = scmp.ne.s32.totalorder %s68, %s71
      %p77 = scmp.eq.s32.totalorder %s18, 0
      %p78 = por %p76, %p77
      %p79 = scmp.ne.s32.totalorder %s68, %s71
      %p80 = scmp.eq.s32.totalorder %s23, 3
      %p81 = por %p79, %p80
      %p82 = scmp.ne.s32.totalorder %s71, %s72
      %p83 = scmp.eq.s32.totalorder %s23, 0
      %p84 = por %p82, %p83
      %p85 = scmp.ne.s32.totalorder %s71, %s72
      %p86 = scmp.eq.s32.totalorder %s24, 3
      %p87 = por %p85, %p86
      %p89 = scmp.ne.s32.totalorder %s72, %s88
      %p90 = scmp.eq.s32.totalorder %s24, 0
      %p91 = por %p89, %p90
      %s92 = ssub.s32 %s25, %s37
      %p93 = scmp.eq.s32.totalorder %s92, 0
      %s95 = sadd.s32 %s94, 1
      %s96 = scalar_select %p93, %s94, %s95
      %p99 = pneg %p93
      %p100 = scmp.eq.s32.totalorder %s18, 3
      %p101 = por %p99, %p100
      %p102 = scmp.ne.s32.totalorder %s94, %s97
      %p103 = scmp.eq.s32.totalorder %s18, 0
      %p104 = por %p102, %p103
      %p105 = scmp.ne.s32.totalorder %s94, %s97
      %p106 = scmp.eq.s32.totalorder %s23, 3
      %p107 = por %p105, %p106
      %p108 = scmp.ne.s32.totalorder %s97, %s98
      %p109 = scmp.eq.s32.totalorder %s23, 0
      %p110 = por %p108, %p109
      %p111 = scmp.ne.s32.totalorder %s97, %s98
      %p112 = scmp.eq.s32.totalorder %s24, 3
      %p113 = por %p111, %p112
      %p115 = scmp.ne.s32.totalorder %s98, %s114
      %p116 = scmp.eq.s32.totalorder %s24, 0
      %p117 = por %p115, %p116
      %s119 = sadd.s32 %s118, 1
      %p122 = scmp.eq.s32.totalorder %s18, 3
      %p123 = scmp.ne.s32.totalorder %s118, %s120
      %p124 = scmp.eq.s32.totalorder %s18, 0
      %p125 = por %p123, %p124
      %p126 = scmp.ne.s32.totalorder %s118, %s120
      %p127 = scmp.eq.s32.totalorder %s23, 3
      %p128 = por %p126, %p127
      %p129 = scmp.ne.s32.totalorder %s120, %s121
      %p130 = scmp.eq.s32.totalorder %s23, 0
      %p131 = por %p129, %p130
      %p132 = scmp.ne.s32.totalorder %s120, %s121
      %p133 = scmp.eq.s32.totalorder %s24, 3
      %p134 = por %p132, %p133
      %p136 = scmp.ne.s32.totalorder %s121, %s135
      %p137 = scmp.eq.s32.totalorder %s24, 0
      %p138 = por %p136, %p137
      %s140 = sadd.s32 %s139, 1
      %p143 = scmp.eq.s32.totalorder %s18, 3
      %p144 = scmp.ne.s32.totalorder %s139, %s141
      %p145 = scmp.eq.s32.totalorder %s18, 0
      %p146 = por %p144, %p145
      %p147 = scmp.ne.s32.totalorder %s139, %s141
      %p148 = scmp.eq.s32.totalorder %s23, 3
      %p149 = por %p147, %p148
      %p150 = scmp.ne.s32.totalorder %s141, %s142
      %p151 = scmp.eq.s32.totalorder %s23, 0
      %p152 = por %p150, %p151
      %p153 = scmp.ne.s32.totalorder %s141, %s142
      %p154 = scmp.eq.s32.totalorder %s24, 3
      %p155 = por %p153, %p154
      %p157 = scmp.ne.s32.totalorder %s142, %s156
      %p158 = scmp.eq.s32.totalorder %s24, 0
      %p159 = por %p157, %p158
      %s161 = sadd.s32 %s160, 1
      %p164 = scmp.eq.s32.totalorder %s18, 3
      %p165 = scmp.ne.s32.totalorder %s160, %s162
      %p166 = scmp.eq.s32.totalorder %s18, 0
      %p167 = por %p165, %p166
      %p168 = scmp.ne.s32.totalorder %s160, %s162
      %p169 = scmp.eq.s32.totalorder %s23, 3
      %p170 = por %p168, %p169
      %p171 = scmp.ne.s32.totalorder %s162, %s163
      %p172 = scmp.eq.s32.totalorder %s23, 0
      %p173 = por %p171, %p172
      %p174 = scmp.ne.s32.totalorder %s162, %s163
      %p175 = scmp.eq.s32.totalorder %s24, 3
      %p176 = por %p174, %p175
      %p178 = scmp.ne.s32.totalorder %s163, %s177
      %p179 = scmp.eq.s32.totalorder %s24, 0
      %p180 = por %p178, %p179
      %s181 = ssub.s32 %s25, %s37
      %s182 = ssub.s32 %s26, %s33
      %s183 = sor.u32 %s181, %s182
      %p184 = scmp.eq.s32.totalorder %s183, 0
      %s186 = sadd.s32 %s185, 1
      %s187 = scalar_select %p184, %s185, %s186
      %p190 = pneg %p184
      %p191 = scmp.eq.s32.totalorder %s18, 3
      %p192 = por %p190, %p191
      %p193 = scmp.ne.s32.totalorder %s185, %s188
      %p194 = scmp.eq.s32.totalorder %s18, 0
      %p195 = por %p193, %p194
      %p196 = scmp.ne.s32.totalorder %s185, %s188
      %p197 = scmp.eq.s32.totalorder %s23, 3
      %p198 = por %p196, %p197
      %p199 = scmp.ne.s32.totalorder %s188, %s189
      %p200 = scmp.eq.s32.totalorder %s23, 0
      %p201 = por %p199, %p200
      %p202 = scmp.ne.s32.totalorder %s188, %s189
      %p203 = scmp.eq.s32.totalorder %s24, 3
      %p204 = por %p202, %p203
      %p206 = scmp.ne.s32.totalorder %s189, %s205
      %p207 = scmp.eq.s32.totalorder %s24, 0
      %p208 = por %p206, %p207
      %p209 = scmp.le.s32.totalorder 1, %s18
      %p210 = scmp.lt.s32.totalorder %s18, 5
      %p211 = pnand %p209, %p210
      %p212 = pneg %p211
      // Predicated region
      $region9: #{tpu_custom_call.1} parent=5 // pred_check
        _
      $region10: #{tpu_custom_call.1} parent=5 // pred_check_branch
        %214 = sbr.rel (%p211) target = $region12
      $region11: #{tpu_custom_call.1} parent=5 // pred_region
        %s215 = ssub.s32 %s18, 1
        // Predicated region
        $region13: #{tpu_custom_call.1} parent=11 // pred_check
          %p216 = pneg %p131
        $region14: #{tpu_custom_call.1} parent=11 // pred_check_branch
          %218 = sbr.rel (%p216) target = $region16
        $region15: #{tpu_custom_call.1} parent=11 // pred_region
          _
        $region16: #{tpu_custom_call.1} parent=11 // pred_fallthru
          _
        // Predicated region
        $region17: #{tpu_custom_call.1} parent=11 // pred_check
          %p219 = pneg %p152
        $region18: #{tpu_custom_call.1} parent=11 // pred_check_branch
          %221 = sbr.rel (%p219) target = $region20
        $region19: #{tpu_custom_call.1} parent=11 // pred_region
          _
        $region20: #{tpu_custom_call.1} parent=11 // pred_fallthru
          _
        // Predicated region
        $region21: #{tpu_custom_call.1} parent=11 // pred_check
          %p222 = pneg %p173
        $region22: #{tpu_custom_call.1} parent=11 // pred_check_branch
          %224 = sbr.rel (%p222) target = $region24
        $region23: #{tpu_custom_call.1} parent=11 // pred_region
          _
        $region24: #{tpu_custom_call.1} parent=11 // pred_fallthru
          _
      $region12: #{tpu_custom_call.1} parent=5 // pred_fallthru
        _
      %p225 = scmp.lt.s32.totalorder %s18, 4
      // Predicated region
      $region25: #{tpu_custom_call.1} parent=5 // pred_check
        %p226 = pneg %p225
      $region26: #{tpu_custom_call.1} parent=5 // pred_check_branch
        %228 = sbr.rel (%p226) target = $region28
      $region27: #{tpu_custom_call.1} parent=5 // pred_region
        // Predicated region
        $region29: #{tpu_custom_call.1} parent=27 // pred_check
          %p229 = pneg %p52
        $region30: #{tpu_custom_call.1} parent=27 // pred_check_branch
          %231 = sbr.rel (%p229) target = $region32
        $region31: #{tpu_custom_call.1} parent=27 // pred_region
          %s232 = sand.u32 %s42, 1
          %s233 = scalar_lea.sflag [#allocation3], %s232
          %s234 = sand.u32 %s42, 1
          %s235 = smul.addr %s234, 32
          %s236 = scalar_lea.vmem [#allocation2], %s235
          %238 = vsyncadd %s233, 0
          %s239 = smul.addr %s25, 8
          %s240 = sadd.s32 %s26, %s239
          %s241 = smul.addr %s240, 8
          %s242 = scalar_lea.hbm %s0, %s241
          %s243 = sshll.u32 %s242, 4
          %s244 = int_to_ptr.hbm [resolvable:$true] %s243
          %s245 = sshll.u32 %s236, 4
          %s246 = int_to_ptr.vmem [resolvable:$true] %s245
          %251 = dma.hbm_to_vmem [thread:$0]  %s244, 512, %s246, %s233, 256, 128, 8
        $region32: #{tpu_custom_call.1} parent=27 // pred_fallthru
          _
        // Predicated region
        $region33: #{tpu_custom_call.1} parent=27 // pred_check
          %p252 = pneg %p78
        $region34: #{tpu_custom_call.1} parent=27 // pred_check_branch
          %254 = sbr.rel (%p252) target = $region36
        $region35: #{tpu_custom_call.1} parent=27 // pred_region
          %p255 = scmp.lt.s32.totalorder %s25, 1
          %s256 = scalar_select %p255, %s25, 1
          %s257 = smul.addr %s256, 8
          %s258 = smul.addr %s257, 4
          %s259 = scalar_lea.vmem %s1, %s258
        $region36: #{tpu_custom_call.1} parent=27 // pred_fallthru
          _
        // Predicated region
        $region37: #{tpu_custom_call.1} parent=27 // pred_check
          %p260 = pneg %p104
        $region38: #{tpu_custom_call.1} parent=27 // pred_check_branch
          %262 = sbr.rel (%p260) target = $region40
        $region39: #{tpu_custom_call.1} parent=27 // pred_region
          %p263 = scmp.lt.s32.totalorder %s25, 1
          %s264 = scalar_select %p263, %s25, 1
          %s265 = smul.addr %s264, 4
          %s266 = smul.addr %s265, 4
          %s267 = scalar_lea.vmem %s2, %s266
        $region40: #{tpu_custom_call.1} parent=27 // pred_fallthru
          _
      $region28: #{tpu_custom_call.1} parent=5 // pred_fallthru
        _
      %p268 = scmp.le.s32.totalorder 1, %s18
      %p269 = scmp.lt.s32.totalorder %s18, 5
      %p270 = pnand %p268, %p269
      %p271 = pneg %p270
      // Predicated region
      $region41: #{tpu_custom_call.1} parent=5 // pred_check
        _
      $region42: #{tpu_custom_call.1} parent=5 // pred_check_branch
        %273 = sbr.rel (%p270) target = $region44
      $region43: #{tpu_custom_call.1} parent=5 // pred_region
        %s274 = ssub.s32 %s18, 1
        %s275 = sand.u32 %s45, 1
        %s276 = scalar_lea.sflag [#allocation3], %s275
        %s277 = sand.u32 %s45, 1
        %s278 = smul.addr %s277, 32
        %s279 = scalar_lea.vmem [#allocation2], %s278
        // Predicated region
        $region45: #{tpu_custom_call.1} parent=43 // pred_check
          %p280 = pneg %p58
        $region46: #{tpu_custom_call.1} parent=43 // pred_check_branch
          %282 = sbr.rel (%p280) target = $region48
        $region47: #{tpu_custom_call.1} parent=43 // pred_region
          %284 = dma.done %s276, 512
        $region48: #{tpu_custom_call.1} parent=43 // pred_fallthru
          _
        %s285 = sand.u32 %s45, 1
        %s286 = scalar_lea.sflag [#allocation3], %s285
        %s287 = sand.u32 %s45, 1
        %s288 = smul.addr %s287, 32
        %s289 = scalar_lea.vmem [#allocation2], %s288
        %p290 = pneg %p58
        %p291 = pneg %p55
        %p292 = scmp.lt.s32.totalorder %s27, 1
        %s293 = scalar_select %p292, %s27, 1
        %s294 = smul.addr %s293, 8
        %s295 = smul.addr %s294, 4
        %s296 = scalar_lea.vmem %s1, %s295
        %p297 = pneg %p84
        %p298 = pneg %p81
        %p299 = scmp.lt.s32.totalorder %s27, 1
        %s300 = scalar_select %p299, %s27, 1
        %s301 = smul.addr %s300, 4
        %s302 = smul.addr %s301, 4
        %s303 = scalar_lea.vmem %s2, %s302
        %p304 = pneg %p110
        %p305 = pneg %p107
        %p306 = pneg %p131
        %p307 = pneg %p128
        %p308 = pneg %p152
        %p309 = pneg %p149
        %p310 = pneg %p173
        %p311 = pneg %p170
        %p312 = pneg %p201
        %p313 = pneg %p198
        %s314 = sand.u32 %s188, 1
        %s315 = scalar_lea.sflag [#allocation4], %s314
        %s316 = sand.u32 %s188, 1
        %s317 = smul.addr %s316, 16
        %s318 = scalar_lea.vmem [#allocation5], %s317
        %p319 = scmp.lt.s32.totalorder %s27, 1
        %s320 = scalar_select %p319, %s27, 1
        %s321 = smul.addr %s320, 8
        %s322 = smul.addr %s321, 4
        %s323 = scalar_lea.vmem %s1, %s322
        %p324 = scmp.lt.s32.totalorder %s27, 1
        %s325 = scalar_select %p324, %s27, 1
        %s326 = smul.addr %s325, 4
        %s327 = smul.addr %s326, 4
        %s328 = scalar_lea.vmem %s2, %s327
        %v330 = vld [vmem:[%s279] sm:$0xff]
        %v331 = vld [vmem:[%s279 + $0x8] sm:$0xff]
        %v332 = vld [vmem:[%s279 + $0x10] sm:$0xff]
        %v333 = vld [vmem:[%s279 + $0x18] sm:$0xff]
        %v334 = vpack.c.bf16 %v331, %v330
        %v335 = vpack.c.bf16 %v333, %v332
        %v336 = vld [vmem:[%s3] sm:$0xf]
        %v337 = vld [vmem:[%s3 + $0x4] sm:$0xf]
        %v338 = vld [vmem:[%s3 + $0x8] sm:$0xf]
        %v339 = vld [vmem:[%s3 + $0xc] sm:$0xf]
        %v344 = vunpack.c.l.b16 %v336
        %v345 = vunpack.c.l.b16 %v337
        %v346 = vunpack.c.l.b16 %v338
        %v347 = vunpack.c.l.b16 %v339
        %v348 = vpack.c.b16 %v345, %v344
        %v349 = vpack.c.b16 %v347, %v346
        %vm350 = vcmask 261120
        %v352 = vsel %vm350, %v348, 0
        %v355 = vsel %vm350, %v349, 0
        %357 = vmatpush.bf16.msra.mxu0 0
        %358 = vmatpush.bf16.msra.mxu0 0
        %359 = vmatpush.bf16.msra.mxu0 0
        %360 = vmatpush.bf16.msra.mxu0 0
        %361 = vmatpush.bf16.msra.mxu0 0
        %362 = vmatpush.bf16.msra.mxu0 0
        %363 = vmatpush.bf16.msra.mxu0 %v335
        %364 = vmatpush.bf16.msra.mxu0 %v334
        %365 = vmatmul.bf16.gmra.mxu0 %v352
        %v366 = vpop.f32.mrf.mxu0
        %v367 = vadd.f32 0.0, %v366
        %v368 = vpop.f32.mrf.mxu0
        %v369 = vadd.f32 0.0, %v368
        %370 = vmatmul.bf16.gmra.mxu0 %v355
        %v371 = vpop.f32.mrf.mxu0
        %v372 = vadd.f32 0.0, %v371
        %v373 = vpop.f32.mrf.mxu0
        %v374 = vadd.f32 0.0, %v373
        %375 = vdwg.mxu0
        %v376 = vpack.c.bf16 %v369, %v367
        %v377 = vpack.c.bf16 %v374, %v372
        %v378 = vld [vmem:[%s323] sm:$0xf]
        %v379 = vld [vmem:[%s323 + $0x4] sm:$0xf]
        %v380 = vld [vmem:[%s323 + $0x8] sm:$0xf]
        %v381 = vld [vmem:[%s323 + $0xc] sm:$0xf]
        %v382 = vld [vmem:[%s323 + $0x10] sm:$0xf]
        %v383 = vld [vmem:[%s323 + $0x14] sm:$0xf]
        %v384 = vld [vmem:[%s323 + $0x18] sm:$0xf]
        %v385 = vld [vmem:[%s323 + $0x1c] sm:$0xf]
        %v394 = vunpack.c.l.b16 %v378
        %v395 = vunpack.c.l.b16 %v379
        %v396 = vunpack.c.l.b16 %v380
        %v397 = vunpack.c.l.b16 %v381
        %v398 = vunpack.c.l.b16 %v382
        %v399 = vunpack.c.l.b16 %v383
        %v400 = vunpack.c.l.b16 %v384
        %v401 = vunpack.c.l.b16 %v385
        %v402 = vpack.c.b16 %v395, %v394
        %v403 = vpack.c.b16 %v397, %v396
        %v404 = vpack.c.b16 %v399, %v398
        %v405 = vpack.c.b16 %v401, %v400
        %v407 = vsel %vm350, %v402, 0
        %v410 = vsel %vm350, %v403, 0
        %v413 = vsel %vm350, %v404, 0
        %v416 = vsel %vm350, %v405, 0
        %418 = vmatpush.bf16.msra.mxu0 0
        %419 = vmatpush.bf16.msra.mxu0 0
        %420 = vmatpush.bf16.msra.mxu0 0
        %421 = vmatpush.bf16.msra.mxu0 0
        %422 = vmatpush.bf16.msra.mxu0 0
        %423 = vmatpush.bf16.msra.mxu0 0
        %424 = vmatpush.bf16.msra.mxu0 %v377
        %425 = vmatpush.bf16.msra.mxu0 %v376
        %426 = vmatmul.bf16.gmra.mxu0 %v407
        %v427 = vpop.f32.mrf.mxu0
        %v428 = vadd.f32 0.0, %v427
        %v429 = vpop.f32.mrf.mxu0
        %v430 = vadd.f32 0.0, %v429
        %431 = vmatmul.bf16.gmra.mxu0 %v410
        %v432 = vpop.f32.mrf.mxu0
        %v433 = vadd.f32 0.0, %v432
        %v434 = vpop.f32.mrf.mxu0
        %v435 = vadd.f32 0.0, %v434
        %436 = vmatmul.bf16.gmra.mxu0 %v413
        %v437 = vpop.f32.mrf.mxu0
        %v438 = vadd.f32 0.0, %v437
        %v439 = vpop.f32.mrf.mxu0
        %v440 = vadd.f32 0.0, %v439
        %441 = vmatmul.bf16.gmra.mxu0 %v416
        %v442 = vpop.f32.mrf.mxu0
        %v443 = vadd.f32 0.0, %v442
        %v444 = vpop.f32.mrf.mxu0
        %v445 = vadd.f32 0.0, %v444
        %446 = vdwg.mxu0
        %v447 = vpack.c.bf16 %v430, %v428
        %v448 = vpack.c.bf16 %v435, %v433
        %v449 = vpack.c.bf16 %v440, %v438
        %v450 = vpack.c.bf16 %v445, %v443
        %v451 = vld [vmem:[%s328] sm:$0xf]
        %v452 = vld [vmem:[%s328 + $0x4] sm:$0xf]
        %v453 = vld [vmem:[%s328 + $0x8] sm:$0xf]
        %v454 = vld [vmem:[%s328 + $0xc] sm:$0xf]
        %v459 = vunpack.c.l.b16 %v451
        %v460 = vunpack.c.l.b16 %v452
        %v461 = vunpack.c.l.b16 %v453
        %v462 = vunpack.c.l.b16 %v454
        %v463 = vpack.c.b16 %v460, %v459
        %v464 = vpack.c.b16 %v462, %v461
        %vm465 = vcmask 523264
        %v467 = vsel %vm465, %v463, 0
        %v470 = vsel %vm465, %v464, 0
        %472 = vmatpush.bf16.msra.mxu0 0
        %473 = vmatpush.bf16.msra.mxu0 0
        %474 = vmatpush.bf16.msra.mxu0 0
        %475 = vmatpush.bf16.msra.mxu0 0
        %476 = vmatpush.bf16.msra.mxu0 %v450
        %477 = vmatpush.bf16.msra.mxu0 %v449
        %478 = vmatpush.bf16.msra.mxu0 %v448
        %479 = vmatpush.bf16.msra.mxu0 %v447
        %480 = vmatmul.bf16.gmra.mxu0 %v467
        %v481 = vpop.f32.mrf.mxu0
        %v482 = vadd.f32 0.0, %v481
        %v483 = vpop.f32.mrf.mxu0
        %v484 = vadd.f32 0.0, %v483
        %485 = vmatmul.bf16.gmra.mxu0 %v470
        %v486 = vpop.f32.mrf.mxu0
        %v487 = vadd.f32 0.0, %v486
        %v488 = vpop.f32.mrf.mxu0
        %v489 = vadd.f32 0.0, %v488
        %490 = vdwg.mxu0
        %v491 = vpack.c.bf16 %v484, %v482
        %v492 = vpack.c.bf16 %v489, %v487
        %v493 = vld [vmem:[%s4] sm:$0xf]
        %v494 = vld [vmem:[%s4 + $0x4] sm:$0xf]
        %v495 = vld [vmem:[%s4 + $0x8] sm:$0xf]
        %v496 = vld [vmem:[%s4 + $0xc] sm:$0xf]
        %v497 = vld [vmem:[%s5] sm:$0xff]
        %v498 = vld [vmem:[%s5 + $0x8] sm:$0xff]
        %v499 = vld [vmem:[%s5 + $0x10] sm:$0xff]
        %v500 = vld [vmem:[%s5 + $0x18] sm:$0xff]
        %502 = vset.pattern.permute.xlu0 0
        %503 = vperm.xlu0 %502, %v497
        %v504 = vpop.permute.xlu0 %503
        %507 = vset.pattern.permute.xlu0 0
        %508 = vperm.xlu0 %507, %v498
        %v509 = vpop.permute.xlu0 %508
        %512 = vset.pattern.permute.xlu0 0
        %513 = vperm.xlu0 %512, %v499
        %v514 = vpop.permute.xlu0 %513
        %517 = vset.pattern.permute.xlu0 0
        %518 = vperm.xlu0 %517, %v500
        %v519 = vpop.permute.xlu0 %518
        %v525 = vunpack.c.l.b16 %v493
        %v526 = vunpack.c.l.b16 %v494
        %v527 = vunpack.c.l.b16 %v495
        %v528 = vunpack.c.l.b16 %v496
        %v529 = vpack.c.b16 %v526, %v525
        %v530 = vpack.c.b16 %v528, %v527
        %v532 = vsel %vm350, %v529, 0
        %v535 = vsel %vm350, %v530, 0
        %537 = vmatpush.bf16.msra.mxu0 0
        %538 = vmatpush.bf16.msra.mxu0 0
        %539 = vmatpush.bf16.msra.mxu0 0
        %540 = vmatpush.bf16.msra.mxu0 0
        %541 = vmatpush.bf16.msra.mxu0 0
        %542 = vmatpush.bf16.msra.mxu0 0
        %543 = vmatpush.bf16.msra.mxu0 %v492
        %544 = vmatpush.bf16.msra.mxu0 %v491
        %545 = vmatmul.bf16.gmra.mxu0 %v532
        %v546 = vpop.f32.mrf.mxu0
        %v547 = vadd.f32 %v504, %v546
        %v548 = vpop.f32.mrf.mxu0
        %v549 = vadd.f32 %v509, %v548
        %550 = vmatmul.bf16.gmra.mxu0 %v535
        %v551 = vpop.f32.mrf.mxu0
        %v552 = vadd.f32 %v514, %v551
        %v553 = vpop.f32.mrf.mxu0
        %v554 = vadd.f32 %v519, %v553
        %555 = vdwg.mxu0
        %v556 = vadd.f32 %v547, %v330
        %v557 = vadd.f32 %v549, %v331
        %v558 = vadd.f32 %v552, %v332
        %v559 = vadd.f32 %v554, %v333
        %v560 = vpack.c.bf16 %v556, %v556
        %v561 = vpack.c.bf16 %v557, %v557
        %v562 = vpack.c.bf16 %v558, %v558
        %v563 = vpack.c.bf16 %v559, %v559
        %564 = vst [vmem:[%s318] sm:$0xf] %v560
        %565 = vst [vmem:[%s318 + $0x4] sm:$0xf] %v561
        %566 = vst [vmem:[%s318 + $0x8] sm:$0xf] %v562
        %567 = vst [vmem:[%s318 + $0xc] sm:$0xf] %v563
        %s568 = sand.u32 %s188, 1
        %s569 = scalar_lea.sflag [#allocation4], %s568
        %s570 = sand.u32 %s188, 1
        %s571 = smul.addr %s570, 16
        %s572 = scalar_lea.vmem [#allocation5], %s571
        // Predicated region
        $region49: #{tpu_custom_call.1} parent=43 // pred_check
          %p573 = pneg %p198
        $region50: #{tpu_custom_call.1} parent=43 // pred_check_branch
          %575 = sbr.rel (%p573) target = $region52
        $region51: #{tpu_custom_call.1} parent=43 // pred_region
          %577 = vsyncadd %s569, 0
          %s578 = smul.addr %s27, 8
          %s579 = sadd.s32 %s28, %s578
          %s580 = smul.addr %s579, 4
          %s581 = scalar_lea.hbm %s6, %s580
          %s582 = sshll.u32 %s572, 4
          %s583 = int_to_ptr.vmem [resolvable:$true] %s582
          %s584 = sshll.u32 %s581, 4
          %s585 = int_to_ptr.hbm [resolvable:$true] %s584
          %590 = dma.vmem_to_hbm [thread:$0]  %s583, 256, %s585, %s569, 64, 128, 4
        $region52: #{tpu_custom_call.1} parent=43 // pred_fallthru
          _
      $region44: #{tpu_custom_call.1} parent=5 // pred_fallthru
        _
      %p591 = scmp.le.s32.totalorder 2, %s18
      // Predicated region
      $region53: #{tpu_custom_call.1} parent=5 // pred_check
        %p592 = pneg %p591
      $region54: #{tpu_custom_call.1} parent=5 // pred_check_branch
        %594 = sbr.rel (%p592) target = $region56
      $region55: #{tpu_custom_call.1} parent=5 // pred_region
        %s595 = ssub.s32 %s18, 2
        // Predicated region
        $region57: #{tpu_custom_call.1} parent=55 // pred_check
          %p596 = pneg %p204
        $region58: #{tpu_custom_call.1} parent=55 // pred_check_branch
          %598 = sbr.rel (%p596) target = $region60
        $region59: #{tpu_custom_call.1} parent=55 // pred_region
          %s599 = sand.u32 %s189, 1
          %s600 = scalar_lea.sflag [#allocation4], %s599
          %s601 = sand.u32 %s189, 1
          %s602 = smul.addr %s601, 16
          %s603 = scalar_lea.vmem [#allocation5], %s602
          %605 = dma.done %s600, 256
        $region60: #{tpu_custom_call.1} parent=55 // pred_fallthru
          _
      $region56: #{tpu_custom_call.1} parent=5 // pred_fallthru
        _
    $region6: #{tpu_custom_call.1} parent=1 // loop_footer
      %s22 = sadd.s32 1, %s18
    $region7: #{tpu_custom_call.1} parent=1 // loop_footer_branch
      %17 = sbr.rel target = $region3
    $region8: #{tpu_custom_call.1} parent=1 // loop_exit
      _
    %606 = vsyncpa [#allocation3], 1
    %s607 = scalar_lea.sflag [#allocation3], 1
    %608 = vsyncpa %s607, 1
    %609 = vsyncpa [#allocation4], 1
    %s610 = scalar_lea.sflag [#allocation4], 1
    %611 = vsyncpa %s610, 1

</llo_original>
